<compile_context>
chip_gen: v5e
topology: v5e:2x2
jax: 0.10.0
libtpu: 0.0.40
codegen_flags: <defaults>
</compile_context>

<pallas_src>
import jax
import jax.numpy as jnp
from jax.experimental import pallas as pl
from jax.experimental.pallas import tpu as pltpu

NEG_SLOPE = 0.01      # nn.LeakyReLU default
TB_MAX = 1024         # batch tile cap: multiple of 256, VMEM-safe on v5e/v6e/v7x


def _leaky_relu(x):
    return jnp.where(x > 0, x, NEG_SLOPE * x)


def _round_up(v, m):
    return ((v + m - 1) // m) * m


def ff_discrete_kernel(x_ref, w1_ref, b1_ref, w2_ref, b2_ref, w3_ref, b3_ref, o_ref):
    # fc_in layer 1: Linear(obs, 2*hidden) + LeakyReLU   (Dropout = identity in eval)
    h1 = jnp.dot(x_ref[...], w1_ref[...], preferred_element_type=jnp.float32) + b1_ref[...]
    h1 = _leaky_relu(h1)
    # fc_in layer 2: Linear(2*hidden, hidden) + LeakyReLU
    h2 = jnp.dot(h1.astype(jnp.bfloat16), w2_ref[...],
                 preferred_element_type=jnp.float32) + b2_ref[...]
    h2 = _leaky_relu(h2)
    # fc_out: Linear(hidden, action_space_padded) — lane-dense store
    o_ref[...] = (jnp.dot(h2.astype(jnp.bfloat16), w3_ref[...],
                          preferred_element_type=jnp.float32)
                  + b3_ref[...]).astype(o_ref.dtype)


@jax.jit
def ff_discrete_forward(x, w1, b1, w2, b2, w3, b3):
    B, obs = x.shape
    H2 = w1.shape[1]
    H = w2.shape[1]
    A = w3.shape[1]
    A_pad = _round_up(A, 128)          # lane-dense output slab

    # Batch tile: multiple of 8 sublanes, capped for VMEM safety across chip generations.
    Bp = _round_up(B, 8)
    if Bp >= TB_MAX:
        TB = TB_MAX
        Bp = _round_up(Bp, TB)
    else:
        TB = Bp
    grid = (Bp // TB,)

    # bf16 MXU operands (f32 accumulation in-kernel); zero-pad batch rows and output lanes.
    xb = jnp.pad(x, ((0, Bp - B), (0, 0))).astype(jnp.bfloat16)
    w1b = w1.astype(jnp.bfloat16)
    w2b = w2.astype(jnp.bfloat16)
    w3b = jnp.pad(w3, ((0, 0), (0, A_pad - A))).astype(jnp.bfloat16)
    b3p = jnp.pad(b3, ((0, 0), (0, A_pad - A)))

    # Weights/biases: constant block index -> stay resident in VMEM across all grid steps.
    resident = lambda shape: pl.BlockSpec(shape, lambda i: tuple(0 for _ in shape))

    flops = 2 * Bp * (obs * H2 + H2 * H + H * A_pad)
    bytes_accessed = (xb.size * 2 + Bp * A_pad * 4
                      + (w1b.size + w2b.size + w3b.size) * 2
                      + (b1.size + b2.size + b3p.size) * 4)

    out = pl.pallas_call(
        ff_discrete_kernel,
        out_shape=jax.ShapeDtypeStruct((Bp, A_pad), jnp.float32),
        grid=grid,
        in_specs=[
            pl.BlockSpec((TB, obs), lambda i: (i, 0)),   # x: batch-tiled, double-buffered
            resident(w1b.shape), resident(b1.shape),
            resident(w2b.shape), resident(b2.shape),
            resident(w3b.shape), resident(b3p.shape),
        ],
        out_specs=pl.BlockSpec((TB, A_pad), lambda i: (i, 0)),
        compiler_params=pltpu.CompilerParams(dimension_semantics=("parallel",)),
        cost_estimate=pl.CostEstimate(flops=flops, transcendentals=0,
                                      bytes_accessed=bytes_accessed),
    )(xb, w1b, b1, w2b, b2, w3b, b3p)
    return out[:B, :A]


def init_params(key, observation_space=8, hidden_size=128, action_space=3):
    """PyTorch-nn.Linear-style init (uniform +/- 1/sqrt(fan_in)).

    Weights are stored transposed relative to PyTorch: (in, out).
    Biases are stored as (1, out) rows for clean 2D broadcasting in-kernel.
    """
    ks = jax.random.split(key, 6)

    def lin(kw, kb, fan_in, fan_out):
        bound = 1.0 / jnp.sqrt(jnp.float32(fan_in))
        w = jax.random.uniform(kw, (fan_in, fan_out), jnp.float32, -bound, bound)
        b = jax.random.uniform(kb, (1, fan_out), jnp.float32, -bound, bound)
        return w, b

    w1, b1 = lin(ks[0], ks[1], observation_space, hidden_size * 2)
    w2, b2 = lin(ks[2], ks[3], hidden_size * 2, hidden_size)
    w3, b3 = lin(ks[4], ks[5], hidden_size, action_space)
    return w1, b1, w2, b2, w3, b3


def reference_forward(x, w1, b1, w2, b2, w3, b3):
    # Same bf16-operand / f32-accumulation math as the kernel, in plain JAX.
    h1 = _leaky_relu(jnp.dot(x.astype(jnp.bfloat16), w1.astype(jnp.bfloat16),
                             preferred_element_type=jnp.float32) + b1)
    h2 = _leaky_relu(jnp.dot(h1.astype(jnp.bfloat16), w2.astype(jnp.bfloat16),
                             preferred_element_type=jnp.float32) + b2)
    return jnp.dot(h2.astype(jnp.bfloat16), w3.astype(jnp.bfloat16),
                   preferred_element_type=jnp.float32) + b3


if __name__ == "__main__":
    key = jax.random.PRNGKey(0)
    k_params, k_x1, k_x2 = jax.random.split(key, 3)

    observation_space, hidden_size, action_space = 8, 128, 3
    params = init_params(k_params, observation_space, hidden_size, action_space)

    # Small case (single grid step, no batch padding beyond sublane multiple).
    batch = 8
    x = jax.random.normal(k_x1, (batch, observation_space), jnp.float32)
    out = jax.block_until_ready(ff_discrete_forward(x, *params))
    ref = reference_forward(x, *params)
    assert out.shape == (batch, action_space), out.shape
    assert jnp.allclose(out, ref, atol=1e-2, rtol=1e-2), "mismatch vs reference (small)"

    # Larger, ragged batch: exercises the multi-step grid + batch/lane padding path.
    batch2 = 2050
    x2 = jax.random.normal(k_x2, (batch2, observation_space), jnp.float32)
    out2 = jax.block_until_ready(ff_discrete_forward(x2, *params))
    ref2 = reference_forward(x2, *params)
    assert out2.shape == (batch2, action_space), out2.shape
    assert jnp.allclose(out2, ref2, atol=1e-2, rtol=1e-2), "mismatch vs reference (large)"

    print("KERNEL_OK")
</pallas_src>

<mosaic_0001>
module attributes {stable_mosaic.version = 11 : i64} {
  func.func @ff_discrete_kernel(%arg0: i32, %arg1: memref<8x8xbf16, #tpu.memory_space<vmem>>, %arg2: memref<8x256xbf16, #tpu.memory_space<vmem>>, %arg3: memref<1x256xf32, #tpu.memory_space<vmem>>, %arg4: memref<256x128xbf16, #tpu.memory_space<vmem>>, %arg5: memref<1x128xf32, #tpu.memory_space<vmem>>, %arg6: memref<128x128xbf16, #tpu.memory_space<vmem>>, %arg7: memref<1x128xf32, #tpu.memory_space<vmem>>, %arg8: memref<8x128xf32, #tpu.memory_space<vmem>>) attributes {dimension_semantics = [#tpu.dimension_semantics<parallel>], iteration_bounds = array<i64: 1>, scalar_prefetch = 0 : i64, scratch_operands = 0 : i64, tpu.core_type = #tpu.core_type<tc>, window_params = [{transform_indices = @transform_0, window_bounds = array<i64: 8, 8>}, {pipeline_mode = #tpu.pipeline_mode<synchronous>, transform_indices = @transform_1, window_bounds = array<i64: 8, 256>}, {pipeline_mode = #tpu.pipeline_mode<synchronous>, transform_indices = @transform_2, window_bounds = array<i64: 1, 256>}, {pipeline_mode = #tpu.pipeline_mode<synchronous>, transform_indices = @transform_3, window_bounds = array<i64: 256, 128>}, {pipeline_mode = #tpu.pipeline_mode<synchronous>, transform_indices = @transform_4, window_bounds = array<i64: 1, 128>}, {pipeline_mode = #tpu.pipeline_mode<synchronous>, transform_indices = @transform_5, window_bounds = array<i64: 128, 128>}, {pipeline_mode = #tpu.pipeline_mode<synchronous>, transform_indices = @transform_6, window_bounds = array<i64: 1, 128>}, {transform_indices = @transform_7, window_bounds = array<i64: 8, 128>}]} {
    %c0 = arith.constant 0 : index
    %c0_0 = arith.constant 0 : index
    %0 = vector.load %arg1[%c0, %c0_0] : memref<8x8xbf16, #tpu.memory_space<vmem>>, vector<8x8xbf16>
    %c0_1 = arith.constant 0 : index
    %c0_2 = arith.constant 0 : index
    %1 = vector.load %arg2[%c0_1, %c0_2] : memref<8x256xbf16, #tpu.memory_space<vmem>>, vector<8x256xbf16>
    %cst = arith.constant dense<0.000000e+00> : vector<8x256xf32>
    %2 = tpu.matmul %0, %1, %cst {dimension_numbers = #tpu.dot_dimension_numbers<[1], [0], [0], [1], [0, 0, 1, 1], [], []>} : vector<8x8xbf16>, vector<8x256xbf16>, vector<8x256xf32> -> vector<8x256xf32>
    %c0_3 = arith.constant 0 : index
    %c0_4 = arith.constant 0 : index
    %3 = vector.load %arg3[%c0_3, %c0_4] : memref<1x256xf32, #tpu.memory_space<vmem>>, vector<1x256xf32>
    %4 = vector.broadcast %3 : vector<1x256xf32> to vector<8x256xf32>
    %5 = arith.addf %2, %4 : vector<8x256xf32>
    %cst_5 = arith.constant 0.000000e+00 : f32
    %6 = vector.broadcast %cst_5 : f32 to vector<8x256xf32>
    %7 = arith.cmpf ogt, %5, %6 : vector<8x256xf32>
    %cst_6 = arith.constant 0.00999999977 : f32
    %8 = vector.broadcast %cst_6 : f32 to vector<8x256xf32>
    %9 = arith.mulf %8, %5 : vector<8x256xf32>
    %10 = arith.select %7, %5, %9 : vector<8x256xi1>, vector<8x256xf32>
    %11 = arith.truncf %10 : vector<8x256xf32> to vector<8x256xbf16>
    %c0_7 = arith.constant 0 : index
    %c0_8 = arith.constant 0 : index
    %12 = vector.load %arg4[%c0_7, %c0_8] : memref<256x128xbf16, #tpu.memory_space<vmem>>, vector<256x128xbf16>
    %cst_9 = arith.constant dense<0.000000e+00> : vector<8x128xf32>
    %13 = tpu.matmul %11, %12, %cst_9 {dimension_numbers = #tpu.dot_dimension_numbers<[1], [0], [0], [1], [0, 0, 1, 1], [], []>} : vector<8x256xbf16>, vector<256x128xbf16>, vector<8x128xf32> -> vector<8x128xf32>
    %c0_10 = arith.constant 0 : index
    %c0_11 = arith.constant 0 : index
    %14 = vector.load %arg5[%c0_10, %c0_11] : memref<1x128xf32, #tpu.memory_space<vmem>>, vector<1x128xf32>
    %15 = vector.broadcast %14 : vector<1x128xf32> to vector<8x128xf32>
    %16 = arith.addf %13, %15 : vector<8x128xf32>
    %cst_12 = arith.constant 0.000000e+00 : f32
    %17 = vector.broadcast %cst_12 : f32 to vector<8x128xf32>
    %18 = arith.cmpf ogt, %16, %17 : vector<8x128xf32>
    %cst_13 = arith.constant 0.00999999977 : f32
    %19 = vector.broadcast %cst_13 : f32 to vector<8x128xf32>
    %20 = arith.mulf %19, %16 : vector<8x128xf32>
    %21 = arith.select %18, %16, %20 : vector<8x128xi1>, vector<8x128xf32>
    %22 = arith.truncf %21 : vector<8x128xf32> to vector<8x128xbf16>
    %c0_14 = arith.constant 0 : index
    %c0_15 = arith.constant 0 : index
    %23 = vector.load %arg6[%c0_14, %c0_15] : memref<128x128xbf16, #tpu.memory_space<vmem>>, vector<128x128xbf16>
    %cst_16 = arith.constant dense<0.000000e+00> : vector<8x128xf32>
    %24 = tpu.matmul %22, %23, %cst_16 {dimension_numbers = #tpu.dot_dimension_numbers<[1], [0], [0], [1], [0, 0, 1, 1], [], []>} : vector<8x128xbf16>, vector<128x128xbf16>, vector<8x128xf32> -> vector<8x128xf32>
    %c0_17 = arith.constant 0 : index
    %c0_18 = arith.constant 0 : index
    %25 = vector.load %arg7[%c0_17, %c0_18] : memref<1x128xf32, #tpu.memory_space<vmem>>, vector<1x128xf32>
    %26 = vector.broadcast %25 : vector<1x128xf32> to vector<8x128xf32>
    %27 = arith.addf %24, %26 : vector<8x128xf32>
    %c0_19 = arith.constant 0 : index
    %c0_20 = arith.constant 0 : index
    %28 = vector.load %arg8[%c0_19, %c0_20] : memref<8x128xf32, #tpu.memory_space<vmem>>, vector<8x128xf32>
    tpu.vector_store %arg8[%c0_19, %c0_20], %27 {strides = array<i32>} : memref<8x128xf32, #tpu.memory_space<vmem>>, vector<8x128xf32>,
    return
  }
  func.func @transform_0(%arg0: i32) -> (i32, i32) {
    %c0_i32 = arith.constant 0 : i32
    %c0_i32_0 = arith.constant 0 : i32
    return %arg0, %c0_i32 : i32, i32
  }
  func.func @transform_1(%arg0: i32) -> (i32, i32) {
    %c0_i32 = arith.constant 0 : i32
    %c0_i32_0 = arith.constant 0 : i32
    %c0_i32_1 = arith.constant 0 : i32
    return %c0_i32, %c0_i32_0 : i32, i32
  }
  func.func @transform_2(%arg0: i32) -> (i32, i32) {
    %c0_i32 = arith.constant 0 : i32
    %c0_i32_0 = arith.constant 0 : i32
    %c0_i32_1 = arith.constant 0 : i32
    return %c0_i32, %c0_i32_0 : i32, i32
  }
  func.func @transform_3(%arg0: i32) -> (i32, i32) {
    %c0_i32 = arith.constant 0 : i32
    %c0_i32_0 = arith.constant 0 : i32
    %c0_i32_1 = arith.constant 0 : i32
    return %c0_i32, %c0_i32_0 : i32, i32
  }
  func.func @transform_4(%arg0: i32) -> (i32, i32) {
    %c0_i32 = arith.constant 0 : i32
    %c0_i32_0 = arith.constant 0 : i32
    %c0_i32_1 = arith.constant 0 : i32
    return %c0_i32, %c0_i32_0 : i32, i32
  }
  func.func @transform_5(%arg0: i32) -> (i32, i32) {
    %c0_i32 = arith.constant 0 : i32
    %c0_i32_0 = arith.constant 0 : i32
    %c0_i32_1 = arith.constant 0 : i32
    return %c0_i32, %c0_i32_0 : i32, i32
  }
  func.func @transform_6(%arg0: i32) -> (i32, i32) {
    %c0_i32 = arith.constant 0 : i32
    %c0_i32_0 = arith.constant 0 : i32
    %c0_i32_1 = arith.constant 0 : i32
    return %c0_i32, %c0_i32_0 : i32, i32
  }
  func.func @transform_7(%arg0: i32) -> (i32, i32) {
    %c0_i32 = arith.constant 0 : i32
    %c0_i32_0 = arith.constant 0 : i32
    return %arg0, %c0_i32 : i32, i32
  }
}

</mosaic_0001>

<llo_original>
// kernel: ff_discrete_forward.1
$region0: #{ff_discrete_forward.1}
  #allocation0 [shape = 'u32[]', space=smem, size = 0x4, offset = 0x4, fixed_abs, tag = 'smem constant byte address 0x4 - core index']
  #allocation1 [shape = 'u32[72,128]{1,0:T(1,128)}', space=vmem, size = 0x9000, scoped, tag = 'internal scratch']
  %s0 = inlined_call_operand.vmem [shape: bf16[8,8], index: 0, kind: input, shape index: {}]
  %s1 = inlined_call_operand.vmem [shape: bf16[8,256], index: 1, kind: input, shape index: {}]
  %s2 = inlined_call_operand.vmem [shape: f32[1,256], index: 2, kind: input, shape index: {}]
  %s3 = inlined_call_operand.vmem [shape: bf16[256,128], index: 3, kind: input, shape index: {}]
  %s4 = inlined_call_operand.vmem [shape: f32[1,128], index: 4, kind: input, shape index: {}]
  %s5 = inlined_call_operand.vmem [shape: bf16[128,128], index: 5, kind: input, shape index: {}]
  %s6 = inlined_call_operand.vmem [shape: f32[1,128], index: 6, kind: input, shape index: {}]
  %s7 = inlined_call_operand.vmem [shape: f32[8,128], index: 7, kind: output, shape index: {}]
  %s8 = sld [smem:[#allocation0]]
  $region38: #{ff_discrete_forward.1} parent=0
    _
  %s10 = ssub.s32 1, %s8
  %s11 = scalar_select 0, %s10, %s8
  // Predicated region
  $region2: #{ff_discrete_forward.1} parent=0 // pred_check
    _
  $region3: #{ff_discrete_forward.1} parent=0 // pred_check_branch
    %13 = sbr.rel (0) target = $region5
  $region4: #{ff_discrete_forward.1} parent=0 // pred_region
    _
  $region5: #{ff_discrete_forward.1} parent=0 // pred_fallthru
    _
  // Predicated region
  $region6: #{ff_discrete_forward.1} parent=0 // pred_check
    _
  $region7: #{ff_discrete_forward.1} parent=0 // pred_check_branch
    %15 = sbr.rel (0) target = $region9
  $region8: #{ff_discrete_forward.1} parent=0 // pred_region
    _
  $region9: #{ff_discrete_forward.1} parent=0 // pred_fallthru
    _
  // Predicated region
  $region10: #{ff_discrete_forward.1} parent=0 // pred_check
    _
  $region11: #{ff_discrete_forward.1} parent=0 // pred_check_branch
    %17 = sbr.rel (0) target = $region13
  $region12: #{ff_discrete_forward.1} parent=0 // pred_region
    _
  $region13: #{ff_discrete_forward.1} parent=0 // pred_fallthru
    _
  // Predicated region
  $region14: #{ff_discrete_forward.1} parent=0 // pred_check
    _
  $region15: #{ff_discrete_forward.1} parent=0 // pred_check_branch
    %19 = sbr.rel (0) target = $region17
  $region16: #{ff_discrete_forward.1} parent=0 // pred_region
    _
  $region17: #{ff_discrete_forward.1} parent=0 // pred_fallthru
    _
  // Predicated region
  $region18: #{ff_discrete_forward.1} parent=0 // pred_check
    _
  $region19: #{ff_discrete_forward.1} parent=0 // pred_check_branch
    %21 = sbr.rel (0) target = $region21
  $region20: #{ff_discrete_forward.1} parent=0 // pred_region
    _
  $region21: #{ff_discrete_forward.1} parent=0 // pred_fallthru
    _
  // Predicated region
  $region22: #{ff_discrete_forward.1} parent=0 // pred_check
    _
  $region23: #{ff_discrete_forward.1} parent=0 // pred_check_branch
    %23 = sbr.rel (0) target = $region25
  $region24: #{ff_discrete_forward.1} parent=0 // pred_region
    _
  $region25: #{ff_discrete_forward.1} parent=0 // pred_fallthru
    _
  // Predicated region
  $region26: #{ff_discrete_forward.1} parent=0 // pred_check
    _
  $region27: #{ff_discrete_forward.1} parent=0 // pred_check_branch
    %25 = sbr.rel (0) target = $region29
  $region28: #{ff_discrete_forward.1} parent=0 // pred_region
    _
  $region29: #{ff_discrete_forward.1} parent=0 // pred_fallthru
    _
  %v27 = vld [vmem:[%s0] sm:$0xf]
  %v28 = vld [vmem:[%s1] sm:$0xff]
  %v29 = vld [vmem:[%s2] sm:$0x3]
  %v31 = vperm.slane %v29, 0
  %v32 = vperm.slane %v29, 1
  %v36 = vunpack.c.l.b16 %v28
  %v37 = vunpack.c.h.b16 %v28
  %v38 = vpack.c.b16 %v36, %v36
  %v39 = vpack.c.b16 %v37, %v37
  %vm40 = vcmask 64512
  %v42 = vsel %vm40, %v27, 0
  %vm44 = vcmask 1043456
  %v46 = vsel %vm44, %v38, 0
  %v49 = vsel %vm44, %v39, 0
  %51 = vmatpush.bf16.msra.mxu0 0
  %52 = vmatpush.bf16.msra.mxu0 0
  %53 = vmatpush.bf16.msra.mxu0 0
  %54 = vmatpush.bf16.msra.mxu0 0
  %55 = vmatpush.bf16.msra.mxu0 0
  %56 = vmatpush.bf16.msra.mxu0 0
  %57 = vmatpush.bf16.msra.mxu0 0
  %58 = vmatpush.bf16.msra.mxu0 %v46
  %59 = vmatmul.bf16.gmra.mxu0 %v42
  %v60 = vpop.f32.mrf.mxu0
  %v61 = vadd.f32 %v31, %v60
  %v62 = vpop.f32.mrf.mxu0
  %63 = vdwg.mxu0
  %64 = vmatpush.bf16.msra.mxu0 0
  %65 = vmatpush.bf16.msra.mxu0 0
  %66 = vmatpush.bf16.msra.mxu0 0
  %67 = vmatpush.bf16.msra.mxu0 0
  %68 = vmatpush.bf16.msra.mxu0 0
  %69 = vmatpush.bf16.msra.mxu0 0
  %70 = vmatpush.bf16.msra.mxu0 0
  %71 = vmatpush.bf16.msra.mxu0 %v49
  %72 = vmatmul.bf16.gmra.mxu0 %v42
  %v73 = vpop.f32.mrf.mxu0
  %v74 = vadd.f32 %v32, %v73
  %v75 = vpop.f32.mrf.mxu0
  %76 = vdwg.mxu0
  %vm77 = vcmp.gt.f32.partialorder %v61, 0.0
  %vm78 = vcmp.gt.f32.partialorder %v74, 0.0
  %v79 = vmul.f32 %v61, 0.01
  %v80 = vmul.f32 %v74, 0.01
  %v81 = vsel %vm77, %v61, %v79
  %v82 = vsel %vm78, %v74, %v80
  %v83 = vpack.c.bf16 %v81, %v81
  %v84 = vpack.c.bf16 %v82, %v82
  %v85 = vld [vmem:[%s3] sm:$0xf]
  %v86 = vld [vmem:[%s3 + $0x4] sm:$0xf]
  %v87 = vld [vmem:[%s3 + $0x8] sm:$0xf]
  %v88 = vld [vmem:[%s3 + $0xc] sm:$0xf]
  %v89 = vld [vmem:[%s3 + $0x10] sm:$0xf]
  %v90 = vld [vmem:[%s3 + $0x14] sm:$0xf]
  %v91 = vld [vmem:[%s3 + $0x18] sm:$0xf]
  %v92 = vld [vmem:[%s3 + $0x1c] sm:$0xf]
  %v93 = vld [vmem:[%s3 + $0x20] sm:$0xf]
  %v94 = vld [vmem:[%s3 + $0x24] sm:$0xf]
  %v95 = vld [vmem:[%s3 + $0x28] sm:$0xf]
  %v96 = vld [vmem:[%s3 + $0x2c] sm:$0xf]
  %v97 = vld [vmem:[%s3 + $0x30] sm:$0xf]
  %v98 = vld [vmem:[%s3 + $0x34] sm:$0xf]
  %v99 = vld [vmem:[%s3 + $0x38] sm:$0xf]
  %v100 = vld [vmem:[%s3 + $0x3c] sm:$0xf]
  %v101 = vld [vmem:[%s3 + $0x40] sm:$0xf]
  %v102 = vld [vmem:[%s3 + $0x44] sm:$0xf]
  %v103 = vld [vmem:[%s3 + $0x48] sm:$0xf]
  %v104 = vld [vmem:[%s3 + $0x4c] sm:$0xf]
  %v105 = vld [vmem:[%s3 + $0x50] sm:$0xf]
  %v106 = vld [vmem:[%s3 + $0x54] sm:$0xf]
  %v107 = vld [vmem:[%s3 + $0x58] sm:$0xf]
  %v108 = vld [vmem:[%s3 + $0x5c] sm:$0xf]
  %v109 = vld [vmem:[%s3 + $0x60] sm:$0xf]
  %v110 = vld [vmem:[%s3 + $0x64] sm:$0xf]
  %v111 = vld [vmem:[%s3 + $0x68] sm:$0xf]
  %v112 = vld [vmem:[%s3 + $0x6c] sm:$0xf]
  %v113 = vld [vmem:[%s3 + $0x70] sm:$0xf]
  %v114 = vld [vmem:[%s3 + $0x74] sm:$0xf]
  %v115 = vld [vmem:[%s3 + $0x78] sm:$0xf]
  %v116 = vld [vmem:[%s3 + $0x7c] sm:$0xf]
  %v117 = vld [vmem:[%s4] sm:$0x1]
  %v119 = vperm.slane %v117, 0
  %v153 = vunpack.c.l.b16 %v85
  %v154 = vunpack.c.l.b16 %v86
  %v155 = vunpack.c.l.b16 %v87
  %v156 = vunpack.c.l.b16 %v88
  %v157 = vunpack.c.l.b16 %v89
  %v158 = vunpack.c.l.b16 %v90
  %v159 = vunpack.c.l.b16 %v91
  %v160 = vunpack.c.l.b16 %v92
  %v161 = vunpack.c.l.b16 %v93
  %v162 = vunpack.c.l.b16 %v94
  %v163 = vunpack.c.l.b16 %v95
  %v164 = vunpack.c.l.b16 %v96
  %v165 = vunpack.c.l.b16 %v97
  %v166 = vunpack.c.l.b16 %v98
  %v167 = vunpack.c.l.b16 %v99
  %v168 = vunpack.c.l.b16 %v100
  %v169 = vunpack.c.l.b16 %v101
  %v170 = vunpack.c.l.b16 %v102
  %v171 = vunpack.c.l.b16 %v103
  %v172 = vunpack.c.l.b16 %v104
  %v173 = vunpack.c.l.b16 %v105
  %v174 = vunpack.c.l.b16 %v106
  %v175 = vunpack.c.l.b16 %v107
  %v176 = vunpack.c.l.b16 %v108
  %v177 = vunpack.c.l.b16 %v109
  %v178 = vunpack.c.l.b16 %v110
  %v179 = vunpack.c.l.b16 %v111
  %v180 = vunpack.c.l.b16 %v112
  %v181 = vunpack.c.l.b16 %v113
  %v182 = vunpack.c.l.b16 %v114
  %v183 = vunpack.c.l.b16 %v115
  %v184 = vunpack.c.l.b16 %v116
  %v185 = vpack.c.b16 %v154, %v153
  %v186 = vpack.c.b16 %v156, %v155
  %v187 = vpack.c.b16 %v158, %v157
  %v188 = vpack.c.b16 %v160, %v159
  %v189 = vpack.c.b16 %v162, %v161
  %v190 = vpack.c.b16 %v164, %v163
  %v191 = vpack.c.b16 %v166, %v165
  %v192 = vpack.c.b16 %v168, %v167
  %v193 = vpack.c.b16 %v170, %v169
  %v194 = vpack.c.b16 %v172, %v171
  %v195 = vpack.c.b16 %v174, %v173
  %v196 = vpack.c.b16 %v176, %v175
  %v197 = vpack.c.b16 %v178, %v177
  %v198 = vpack.c.b16 %v180, %v179
  %v199 = vpack.c.b16 %v182, %v181
  %v200 = vpack.c.b16 %v184, %v183
  %217 = vmatpush.bf16.msra.mxu0 %v192
  %218 = vmatpush.bf16.msra.mxu0 %v191
  %219 = vmatpush.bf16.msra.mxu0 %v190
  %220 = vmatpush.bf16.msra.mxu0 %v189
  %221 = vmatpush.bf16.msra.mxu0 %v188
  %222 = vmatpush.bf16.msra.mxu0 %v187
  %223 = vmatpush.bf16.msra.mxu0 %v186
  %224 = vmatpush.bf16.msra.mxu0 %v185
  %225 = vmatmul.bf16.gmra.mxu0 %v83
  %v226 = vpop.f32.mrf.mxu0
  %v227 = vadd.f32 %v119, %v226
  %v228 = vpop.f32.mrf.mxu0
  %229 = vdwg.mxu0
  %230 = vmatpush.bf16.msra.mxu0 %v200
  %231 = vmatpush.bf16.msra.mxu0 %v199
  %232 = vmatpush.bf16.msra.mxu0 %v198
  %233 = vmatpush.bf16.msra.mxu0 %v197
  %234 = vmatpush.bf16.msra.mxu0 %v196
  %235 = vmatpush.bf16.msra.mxu0 %v195
  %236 = vmatpush.bf16.msra.mxu0 %v194
  %237 = vmatpush.bf16.msra.mxu0 %v193
  %238 = vmatmul.bf16.gmra.mxu0 %v84
  %v239 = vpop.f32.mrf.mxu0
  %v240 = vadd.f32 %v227, %v239
  %v241 = vpop.f32.mrf.mxu0
  %242 = vdwg.mxu0
  %vm243 = vcmp.gt.f32.partialorder %v240, 0.0
  %v244 = vmul.f32 %v240, 0.01
  %v245 = vsel %vm243, %v240, %v244
  %v246 = vpack.c.bf16 %v245, %v245
  %v247 = vld [vmem:[%s5] sm:$0xf]
  %v248 = vld [vmem:[%s5 + $0x4] sm:$0xf]
  %v249 = vld [vmem:[%s5 + $0x8] sm:$0xf]
  %v250 = vld [vmem:[%s5 + $0xc] sm:$0xf]
  %v251 = vld [vmem:[%s5 + $0x10] sm:$0xf]
  %v252 = vld [vmem:[%s5 + $0x14] sm:$0xf]
  %v253 = vld [vmem:[%s5 + $0x18] sm:$0xf]
  %v254 = vld [vmem:[%s5 + $0x1c] sm:$0xf]
  %v255 = vld [vmem:[%s5 + $0x20] sm:$0xf]
  %v256 = vld [vmem:[%s5 + $0x24] sm:$0xf]
  %v257 = vld [vmem:[%s5 + $0x28] sm:$0xf]
  %v258 = vld [vmem:[%s5 + $0x2c] sm:$0xf]
  %v259 = vld [vmem:[%s5 + $0x30] sm:$0xf]
  %v260 = vld [vmem:[%s5 + $0x34] sm:$0xf]
  %v261 = vld [vmem:[%s5 + $0x38] sm:$0xf]
  %v262 = vld [vmem:[%s5 + $0x3c] sm:$0xf]
  %v263 = vld [vmem:[%s6] sm:$0x1]
  %v265 = vperm.slane %v263, 0
  %v283 = vunpack.c.l.b16 %v247
  %v284 = vunpack.c.l.b16 %v248
  %v285 = vunpack.c.l.b16 %v249
  %v286 = vunpack.c.l.b16 %v250
  %v287 = vunpack.c.l.b16 %v251
  %v288 = vunpack.c.l.b16 %v252
  %v289 = vunpack.c.l.b16 %v253
  %v290 = vunpack.c.l.b16 %v254
  %v291 = vunpack.c.l.b16 %v255
  %v292 = vunpack.c.l.b16 %v256
  %v293 = vunpack.c.l.b16 %v257
  %v294 = vunpack.c.l.b16 %v258
  %v295 = vunpack.c.l.b16 %v259
  %v296 = vunpack.c.l.b16 %v260
  %v297 = vunpack.c.l.b16 %v261
  %v298 = vunpack.c.l.b16 %v262
  %v299 = vpack.c.b16 %v284, %v283
  %v300 = vpack.c.b16 %v286, %v285
  %v301 = vpack.c.b16 %v288, %v287
  %v302 = vpack.c.b16 %v290, %v289
  %v303 = vpack.c.b16 %v292, %v291
  %v304 = vpack.c.b16 %v294, %v293
  %v305 = vpack.c.b16 %v296, %v295
  %v306 = vpack.c.b16 %v298, %v297
  %315 = vmatpush.bf16.msra.mxu0 %v306
  %316 = vmatpush.bf16.msra.mxu0 %v305
  %317 = vmatpush.bf16.msra.mxu0 %v304
  %318 = vmatpush.bf16.msra.mxu0 %v303
  %319 = vmatpush.bf16.msra.mxu0 %v302
  %320 = vmatpush.bf16.msra.mxu0 %v301
  %321 = vmatpush.bf16.msra.mxu0 %v300
  %322 = vmatpush.bf16.msra.mxu0 %v299
  %323 = vmatmul.bf16.gmra.mxu0 %v246
  %v324 = vpop.f32.mrf.mxu0
  %v325 = vadd.f32 %v265, %v324
  %v326 = vpop.f32.mrf.mxu0
  %327 = vdwg.mxu0
  %328 = vst [vmem:[%s7] sm:$0xff] %v325
  // Predicated region
  $region30: #{ff_discrete_forward.1} parent=0 // pred_check
    _
  $region31: #{ff_discrete_forward.1} parent=0 // pred_check_branch
    %330 = sbr.rel (0) target = $region33
  $region32: #{ff_discrete_forward.1} parent=0 // pred_region
    _
  $region33: #{ff_discrete_forward.1} parent=0 // pred_fallthru
    _
  // Predicated region
  $region34: #{ff_discrete_forward.1} parent=0 // pred_check
    _
  $region35: #{ff_discrete_forward.1} parent=0 // pred_check_branch
    %332 = sbr.rel (0) target = $region37
  $region36: #{ff_discrete_forward.1} parent=0 // pred_region
    _
  $region37: #{ff_discrete_forward.1} parent=0 // pred_fallthru
    _

</llo_original>
